<compile_context>
chip_gen: v5e
topology: v5e:2x2
jax: 0.10.0
libtpu: 0.0.40
codegen_flags: <defaults>
</compile_context>

<pallas_src>
import functools

import jax
import jax.numpy as jnp
import numpy as np
from jax.experimental import pallas as pl
from jax.experimental.pallas import tpu as pltpu

EPS = 1e-8
MATMUL_DTYPE = jnp.bfloat16  # MXU operands (f32 accumulation); big win on v6e/v7x.


def _round_up(x, m):
    return ((x + m - 1) // m) * m


# ----------------------------------------------------------------------------
# Fused kernel:  conv1d(K taps) + bias + gLN (single-pass stats) + residual add
# ----------------------------------------------------------------------------
def _conv_gln_add_kernel(xp_ref, res_ref, w_ref, b_ref, g_ref, bt_ref, o_ref,
                         *, K, T_out, T_blk):
    # xp_ref : (1, Cin, Tp)   nearest-interp'd, conv-padded, lane-padded input (zeros elsewhere)
    # res_ref: (1, Cout, T_out) residual (the tensor being fused into)
    # w_ref  : (K, Cout, Cin) conv weights, tap-major
    # b_ref  : (Cout, 1) conv bias;  g_ref/bt_ref: (Cout, 1) gLN affine params
    # o_ref  : (1, Cout, T_out)
    Cout = o_ref.shape[1]
    xpb = xp_ref[0].astype(MATMUL_DTYPE)              # (Cin, Tp), cast once

    acc = jnp.zeros((Cout, T_blk), jnp.float32)
    for k in range(K):                                 # K small (1 or 3): unrolled MXU matmuls
        wk = w_ref[k].astype(MATMUL_DTYPE)             # (Cout, Cin)
        acc = acc + jnp.dot(wk, xpb[:, k:k + T_blk],
                            preferred_element_type=jnp.float32)

    y = acc + b_ref[...]                               # bias, broadcast over lanes

    # gLN over (Cout, T_out): single pass (sum & sum-of-squares), masking padded tail lanes.
    lane = jax.lax.broadcasted_iota(jnp.int32, (1, T_blk), 1)
    valid = lane < T_out
    ym = jnp.where(valid, y, 0.0)
    cnt = float(Cout * T_out)
    s = jnp.sum(ym)
    ss = jnp.sum(ym * ym)
    mean = s / cnt
    var = jnp.maximum(ss / cnt - mean * mean, 0.0)
    inv = jax.lax.rsqrt(var + EPS)

    out = g_ref[...] * ((y - mean) * inv) + bt_ref[...]
    o_ref[0] = out[:, :T_out] + res_ref[0]


def _prep_conv_input(x, T_out, K, Tp):
    """Fold nearest-interp + conv 'same' zero-pad + lane-pad into one XLA gather/select."""
    B, Cin, T_in = x.shape
    pad = (K - 1) // 2
    j = jnp.arange(Tp)
    t = j - pad
    valid = (t >= 0) & (t < T_out)
    src = (jnp.clip(t, 0, T_out - 1) * T_in) // T_out   # PyTorch 'nearest': floor(t * in / out)
    gathered = jnp.take(x, src, axis=-1)                # (B, Cin, Tp)
    return jnp.where(valid[None, None, :], gathered, 0.0).astype(jnp.float32)


def conv_gln_add(x, residual, w, b, gamma, beta, kernel_size):
    """out = gLN(Conv1d_K(nearest_interp(x, T_res))) + residual, one fused pallas_call."""
    assert kernel_size % 2 == 1, "odd kernel_size required for 'same'-length conv"
    B, Cin, _ = x.shape
    _, Cout, T_out = residual.shape
    K = kernel_size

    T_blk = _round_up(T_out, 128)                       # lane-dense accumulator width
    Tp = _round_up(T_blk + K - 1, 128)                  # padded input width (>= T_blk + K - 1)
    xp = _prep_conv_input(x, T_out, K, Tp)              # (B, Cin, Tp)
    w_tap = jnp.transpose(w, (2, 0, 1))                 # (Cout, Cin, K) -> (K, Cout, Cin)

    kern = functools.partial(_conv_gln_add_kernel, K=K, T_out=T_out, T_blk=T_blk)
    return pl.pallas_call(
        kern,
        out_shape=jax.ShapeDtypeStruct((B, Cout, T_out), jnp.float32),
        grid=(B,),
        in_specs=[
            pl.BlockSpec((1, Cin, Tp), lambda bb: (bb, 0, 0)),
            pl.BlockSpec((1, Cout, T_out), lambda bb: (bb, 0, 0)),
            pl.BlockSpec((K, Cout, Cin), lambda bb: (0, 0, 0)),
            pl.BlockSpec((Cout, 1), lambda bb: (0, 0)),
            pl.BlockSpec((Cout, 1), lambda bb: (0, 0)),
            pl.BlockSpec((Cout, 1), lambda bb: (0, 0)),
        ],
        out_specs=pl.BlockSpec((1, Cout, T_out), lambda bb: (bb, 0, 0)),
        compiler_params=pltpu.CompilerParams(
            dimension_semantics=("parallel",),
            vmem_limit_bytes=48 * 1024 * 1024,
        ),
    )(xp, residual, w_tap, b, gamma, beta)


# ----------------------------------------------------------------------------
# SumFusion forward
# ----------------------------------------------------------------------------
def sum_fusion_forward(audio, video, params, kernel_size, video_fusion=True):
    # wrangle_dims(): both tensors are 3-D (B, C, T) -> no unsqueeze needed.
    if video_fusion:
        video_fused = conv_gln_add(
            audio, video,
            params["audio_conv_w"], params["audio_conv_b"],
            params["audio_gln_g"], params["audio_gln_b"], kernel_size)
    else:
        video_fused = video
    audio_fused = conv_gln_add(
        video, audio,
        params["video_conv_w"], params["video_conv_b"],
        params["video_gln_g"], params["video_gln_b"], kernel_size)
    # unwrangle_dims(): no-op.
    return audio_fused, video_fused


# ----------------------------------------------------------------------------
# Pure-JAX f32 reference (same math, no Pallas) for correctness check
# ----------------------------------------------------------------------------
def _ref_nearest(x, out_T):
    in_T = x.shape[-1]
    idx = (jnp.arange(out_T) * in_T) // out_T
    return jnp.take(x, idx, axis=-1)


def _ref_conv_gln_add(x, residual, w, b, gamma, beta, K):
    T_out = residual.shape[-1]
    xi = _ref_nearest(x, T_out)
    pad = (K - 1) // 2
    xp = jnp.pad(xi, ((0, 0), (0, 0), (pad, pad)))
    y = sum(jnp.einsum("oc,bct->bot", w[:, :, k], xp[:, :, k:k + T_out]) for k in range(K))
    y = y + b[None]
    mean = y.mean(axis=(1, 2), keepdims=True)
    var = ((y - mean) ** 2).mean(axis=(1, 2), keepdims=True)
    yn = gamma[None] * (y - mean) / jnp.sqrt(var + EPS) + beta[None]
    return yn + residual


def _ref_forward(audio, video, p, K, video_fusion=True):
    if video_fusion:
        vf = _ref_conv_gln_add(audio, video, p["audio_conv_w"], p["audio_conv_b"],
                               p["audio_gln_g"], p["audio_gln_b"], K)
    else:
        vf = video
    af = _ref_conv_gln_add(video, audio, p["video_conv_w"], p["video_conv_b"],
                           p["video_gln_g"], p["video_gln_b"], K)
    return af, vf


# ----------------------------------------------------------------------------
# Deterministic parameter init (PyTorch Conv1d layout: (Cout, Cin, K))
# ----------------------------------------------------------------------------
def make_params(key, Ca, Cv, K):
    ks = jax.random.split(key, 8)
    return {
        "audio_conv_w": 0.2 * jax.random.normal(ks[0], (Cv, Ca, K), jnp.float32),
        "audio_conv_b": 0.05 * jax.random.normal(ks[1], (Cv, 1), jnp.float32),
        "audio_gln_g": 1.0 + 0.1 * jax.random.normal(ks[2], (Cv, 1), jnp.float32),
        "audio_gln_b": 0.1 * jax.random.normal(ks[3], (Cv, 1), jnp.float32),
        "video_conv_w": 0.2 * jax.random.normal(ks[4], (Ca, Cv, K), jnp.float32),
        "video_conv_b": 0.05 * jax.random.normal(ks[5], (Ca, 1), jnp.float32),
        "video_gln_g": 1.0 + 0.1 * jax.random.normal(ks[6], (Ca, 1), jnp.float32),
        "video_gln_b": 0.1 * jax.random.normal(ks[7], (Ca, 1), jnp.float32),
    }


if __name__ == "__main__":
    B, Ca, Cv, Ta, Tv, K = 2, 8, 16, 32, 16, 3

    key = jax.random.PRNGKey(0)
    k_a, k_v, k_p = jax.random.split(key, 3)
    audio = jax.random.normal(k_a, (B, Ca, Ta), jnp.float32)
    video = jax.random.normal(k_v, (B, Cv, Tv), jnp.float32)
    params = make_params(k_p, Ca, Cv, K)

    fwd = jax.jit(lambda a, v, p: sum_fusion_forward(a, v, p, K, video_fusion=True))
    audio_fused, video_fused = fwd(audio, video, params)
    jax.block_until_ready((audio_fused, video_fused))

    # correctness vs. pure-JAX f32 reference (tolerance covers bf16 MXU operands)
    ref_a, ref_v = _ref_forward(audio, video, params, K, video_fusion=True)
    np.testing.assert_allclose(np.asarray(audio_fused), np.asarray(ref_a), rtol=2e-2, atol=2e-2)
    np.testing.assert_allclose(np.asarray(video_fused), np.asarray(ref_v), rtol=2e-2, atol=2e-2)

    assert audio_fused.shape == (B, Ca, Ta) and video_fused.shape == (B, Cv, Tv)
    print("KERNEL_OK")
</pallas_src>

<mosaic_0001>
module attributes {stable_mosaic.version = 11 : i64} {
  func.func @_conv_gln_add_kernel(%arg0: i32, %arg1: memref<1x16x256xf32, #tpu.memory_space<vmem>>, %arg2: memref<1x8x32xf32, #tpu.memory_space<vmem>>, %arg3: memref<3x8x16xf32, #tpu.memory_space<vmem>>, %arg4: memref<8x1xf32, #tpu.memory_space<vmem>>, %arg5: memref<8x1xf32, #tpu.memory_space<vmem>>, %arg6: memref<8x1xf32, #tpu.memory_space<vmem>>, %arg7: memref<1x8x32xf32, #tpu.memory_space<vmem>>) attributes {dimension_semantics = [#tpu.dimension_semantics<parallel>], iteration_bounds = array<i64: 2>, scalar_prefetch = 0 : i64, scratch_operands = 0 : i64, tpu.core_type = #tpu.core_type<tc>, window_params = [{transform_indices = @transform_0, window_bounds = array<i64: 1, 16, 256>}, {transform_indices = @transform_1, window_bounds = array<i64: 1, 8, 32>}, {pipeline_mode = #tpu.pipeline_mode<synchronous>, transform_indices = @transform_2, window_bounds = array<i64: 3, 8, 16>}, {pipeline_mode = #tpu.pipeline_mode<synchronous>, transform_indices = @transform_3, window_bounds = array<i64: 8, 1>}, {pipeline_mode = #tpu.pipeline_mode<synchronous>, transform_indices = @transform_4, window_bounds = array<i64: 8, 1>}, {pipeline_mode = #tpu.pipeline_mode<synchronous>, transform_indices = @transform_5, window_bounds = array<i64: 8, 1>}, {transform_indices = @transform_6, window_bounds = array<i64: 1, 8, 32>}]} {
    %c0 = arith.constant 0 : index
    %c0_0 = arith.constant 0 : index
    %c0_1 = arith.constant 0 : index
    %0 = vector.load %arg1[%c0, %c0_0, %c0_1] : memref<1x16x256xf32, #tpu.memory_space<vmem>>, vector<1x16x256xf32>
    %1 = vector.shape_cast %0 : vector<1x16x256xf32> to vector<16x256xf32>
    %2 = arith.truncf %1 : vector<16x256xf32> to vector<16x256xbf16>
    %cst = arith.constant 0.000000e+00 : f32
    %3 = vector.broadcast %cst : f32 to vector<8x128xf32>
    %c0_2 = arith.constant 0 : index
    %c0_3 = arith.constant 0 : index
    %c0_4 = arith.constant 0 : index
    %4 = vector.load %arg3[%c0_2, %c0_3, %c0_4] : memref<3x8x16xf32, #tpu.memory_space<vmem>>, vector<1x8x16xf32>
    %5 = vector.shape_cast %4 : vector<1x8x16xf32> to vector<8x16xf32>
    %6 = arith.truncf %5 : vector<8x16xf32> to vector<8x16xbf16>
    %7 = vector.extract_strided_slice %2 {offsets = [0, 0], sizes = [16, 128], strides = [1, 1]} : vector<16x256xbf16> to vector<16x128xbf16>
    %cst_5 = arith.constant dense<0.000000e+00> : vector<8x128xf32>
    %8 = tpu.matmul %6, %7, %cst_5 {dimension_numbers = #tpu.dot_dimension_numbers<[1], [0], [0], [1], [0, 0, 1, 1], [], []>} : vector<8x16xbf16>, vector<16x128xbf16>, vector<8x128xf32> -> vector<8x128xf32>
    %9 = arith.addf %3, %8 : vector<8x128xf32>
    %c1 = arith.constant 1 : index
    %c0_6 = arith.constant 0 : index
    %c0_7 = arith.constant 0 : index
    %10 = vector.load %arg3[%c1, %c0_6, %c0_7] : memref<3x8x16xf32, #tpu.memory_space<vmem>>, vector<1x8x16xf32>
    %11 = vector.shape_cast %10 : vector<1x8x16xf32> to vector<8x16xf32>
    %12 = arith.truncf %11 : vector<8x16xf32> to vector<8x16xbf16>
    %13 = vector.extract_strided_slice %2 {offsets = [0, 1], sizes = [16, 128], strides = [1, 1]} : vector<16x256xbf16> to vector<16x128xbf16>
    %cst_8 = arith.constant dense<0.000000e+00> : vector<8x128xf32>
    %14 = tpu.matmul %12, %13, %cst_8 {dimension_numbers = #tpu.dot_dimension_numbers<[1], [0], [0], [1], [0, 0, 1, 1], [], []>} : vector<8x16xbf16>, vector<16x128xbf16>, vector<8x128xf32> -> vector<8x128xf32>
    %15 = arith.addf %9, %14 : vector<8x128xf32>
    %c2 = arith.constant 2 : index
    %c0_9 = arith.constant 0 : index
    %c0_10 = arith.constant 0 : index
    %16 = vector.load %arg3[%c2, %c0_9, %c0_10] : memref<3x8x16xf32, #tpu.memory_space<vmem>>, vector<1x8x16xf32>
    %17 = vector.shape_cast %16 : vector<1x8x16xf32> to vector<8x16xf32>
    %18 = arith.truncf %17 : vector<8x16xf32> to vector<8x16xbf16>
    %19 = vector.extract_strided_slice %2 {offsets = [0, 2], sizes = [16, 128], strides = [1, 1]} : vector<16x256xbf16> to vector<16x128xbf16>
    %cst_11 = arith.constant dense<0.000000e+00> : vector<8x128xf32>
    %20 = tpu.matmul %18, %19, %cst_11 {dimension_numbers = #tpu.dot_dimension_numbers<[1], [0], [0], [1], [0, 0, 1, 1], [], []>} : vector<8x16xbf16>, vector<16x128xbf16>, vector<8x128xf32> -> vector<8x128xf32>
    %21 = arith.addf %15, %20 : vector<8x128xf32>
    %c0_12 = arith.constant 0 : index
    %c0_13 = arith.constant 0 : index
    %22 = vector.load %arg4[%c0_12, %c0_13] : memref<8x1xf32, #tpu.memory_space<vmem>>, vector<8x1xf32>
    %23 = vector.broadcast %22 : vector<8x1xf32> to vector<8x128xf32>
    %24 = arith.addf %21, %23 : vector<8x128xf32>
    %25 = tpu.iota {dimensions = array<i32: 1>} : vector<1x128xi32>
    %c32_i32 = arith.constant 32 : i32
    %26 = vector.broadcast %c32_i32 : i32 to vector<1x128xi32>
    %27 = arith.cmpi slt, %25, %26 : vector<1x128xi32>
    %cst_14 = arith.constant 0.000000e+00 : f32
    %28 = vector.shape_cast %27 : vector<1x128xi1> to vector<1x128xi1>
    %29 = vector.broadcast %28 : vector<1x128xi1> to vector<8x128xi1>
    %30 = vector.broadcast %cst_14 : f32 to vector<8x128xf32>
    %31 = arith.select %29, %24, %30 : vector<8x128xi1>, vector<8x128xf32>
    %32 = vector.shape_cast %31 : vector<8x128xf32> to vector<1x8x128xf32>
    %cst_15 = arith.constant dense<0.000000e+00> : vector<1xf32>
    %33 = vector.multi_reduction <add>, %32, %cst_15 [1, 2] : vector<1x8x128xf32> to vector<1xf32>
    %34 = vector.shape_cast %33 : vector<1xf32> to vector<1x1x1xf32>
    %35 = vector.extract %34[0, 0, 0] : f32 from vector<1x1x1xf32>
    %36 = arith.mulf %31, %31 : vector<8x128xf32>
    %37 = vector.shape_cast %36 : vector<8x128xf32> to vector<1x8x128xf32>
    %cst_16 = arith.constant dense<0.000000e+00> : vector<1xf32>
    %38 = vector.multi_reduction <add>, %37, %cst_16 [1, 2] : vector<1x8x128xf32> to vector<1xf32>
    %39 = vector.shape_cast %38 : vector<1xf32> to vector<1x1x1xf32>
    %40 = vector.extract %39[0, 0, 0] : f32 from vector<1x1x1xf32>
    %cst_17 = arith.constant 2.560000e+02 : f32
    %41 = arith.divf %35, %cst_17 : f32
    %cst_18 = arith.constant 2.560000e+02 : f32
    %42 = arith.divf %40, %cst_18 : f32
    %43 = arith.mulf %41, %41 : f32
    %44 = arith.subf %42, %43 : f32
    %cst_19 = arith.constant 0.000000e+00 : f32
    %45 = arith.maximumf %44, %cst_19 : f32
    %cst_20 = arith.constant 9.99999993E-9 : f32
    %46 = arith.addf %45, %cst_20 : f32
    %47 = math.rsqrt %46 : f32
    %c0_21 = arith.constant 0 : index
    %c0_22 = arith.constant 0 : index
    %48 = vector.load %arg5[%c0_21, %c0_22] : memref<8x1xf32, #tpu.memory_space<vmem>>, vector<8x1xf32>
    %49 = vector.broadcast %41 : f32 to vector<8x128xf32>
    %50 = arith.subf %24, %49 : vector<8x128xf32>
    %51 = vector.broadcast %47 : f32 to vector<8x128xf32>
    %52 = arith.mulf %50, %51 : vector<8x128xf32>
    %53 = vector.broadcast %48 : vector<8x1xf32> to vector<8x128xf32>
    %54 = arith.mulf %53, %52 : vector<8x128xf32>
    %c0_23 = arith.constant 0 : index
    %c0_24 = arith.constant 0 : index
    %55 = vector.load %arg6[%c0_23, %c0_24] : memref<8x1xf32, #tpu.memory_space<vmem>>, vector<8x1xf32>
    %56 = vector.broadcast %55 : vector<8x1xf32> to vector<8x128xf32>
    %57 = arith.addf %54, %56 : vector<8x128xf32>
    %58 = vector.extract_strided_slice %57 {offsets = [0, 0], sizes = [8, 32], strides = [1, 1]} : vector<8x128xf32> to vector<8x32xf32>
    %c0_25 = arith.constant 0 : index
    %c0_26 = arith.constant 0 : index
    %c0_27 = arith.constant 0 : index
    %59 = vector.load %arg2[%c0_25, %c0_26, %c0_27] : memref<1x8x32xf32, #tpu.memory_space<vmem>>, vector<1x8x32xf32>
    %60 = vector.shape_cast %59 : vector<1x8x32xf32> to vector<8x32xf32>
    %61 = arith.addf %58, %60 : vector<8x32xf32>
    %c0_28 = arith.constant 0 : index
    %c0_29 = arith.constant 0 : index
    %c0_30 = arith.constant 0 : index
    %62 = vector.load %arg7[%c0_28, %c0_29, %c0_30] : memref<1x8x32xf32, #tpu.memory_space<vmem>>, vector<1x8x32xf32>
    %63 = vector.shape_cast %62 : vector<1x8x32xf32> to vector<8x32xf32>
    %64 = vector.shape_cast %61 : vector<8x32xf32> to vector<1x8x32xf32>
    tpu.vector_store %arg7[%c0_28, %c0_29, %c0_30], %64 {strides = array<i32>} : memref<1x8x32xf32, #tpu.memory_space<vmem>>, vector<1x8x32xf32>,
    return
  }
  func.func @transform_0(%arg0: i32) -> (i32, i32, i32) {
    %c0_i32 = arith.constant 0 : i32
    %c0_i32_0 = arith.constant 0 : i32
    %c0_i32_1 = arith.constant 0 : i32
    return %arg0, %c0_i32, %c0_i32_0 : i32, i32, i32
  }
  func.func @transform_1(%arg0: i32) -> (i32, i32, i32) {
    %c0_i32 = arith.constant 0 : i32
    %c0_i32_0 = arith.constant 0 : i32
    %c0_i32_1 = arith.constant 0 : i32
    return %arg0, %c0_i32, %c0_i32_0 : i32, i32, i32
  }
  func.func @transform_2(%arg0: i32) -> (i32, i32, i32) {
    %c0_i32 = arith.constant 0 : i32
    %c0_i32_0 = arith.constant 0 : i32
    %c0_i32_1 = arith.constant 0 : i32
    %c0_i32_2 = arith.constant 0 : i32
    return %c0_i32, %c0_i32_0, %c0_i32_1 : i32, i32, i32
  }
  func.func @transform_3(%arg0: i32) -> (i32, i32) {
    %c0_i32 = arith.constant 0 : i32
    %c0_i32_0 = arith.constant 0 : i32
    %c0_i32_1 = arith.constant 0 : i32
    return %c0_i32, %c0_i32_0 : i32, i32
  }
  func.func @transform_4(%arg0: i32) -> (i32, i32) {
    %c0_i32 = arith.constant 0 : i32
    %c0_i32_0 = arith.constant 0 : i32
    %c0_i32_1 = arith.constant 0 : i32
    return %c0_i32, %c0_i32_0 : i32, i32
  }
  func.func @transform_5(%arg0: i32) -> (i32, i32) {
    %c0_i32 = arith.constant 0 : i32
    %c0_i32_0 = arith.constant 0 : i32
    %c0_i32_1 = arith.constant 0 : i32
    return %c0_i32, %c0_i32_0 : i32, i32
  }
  func.func @transform_6(%arg0: i32) -> (i32, i32, i32) {
    %c0_i32 = arith.constant 0 : i32
    %c0_i32_0 = arith.constant 0 : i32
    %c0_i32_1 = arith.constant 0 : i32
    return %arg0, %c0_i32, %c0_i32_0 : i32, i32, i32
  }
}

module attributes {stable_mosaic.version = 11 : i64} {
  func.func @_conv_gln_add_kernel(%arg0: i32, %arg1: memref<1x8x256xf32, #tpu.memory_space<vmem>>, %arg2: memref<1x16x16xf32, #tpu.memory_space<vmem>>, %arg3: memref<3x16x8xf32, #tpu.memory_space<vmem>>, %arg4: memref<16x1xf32, #tpu.memory_space<vmem>>, %arg5: memref<16x1xf32, #tpu.memory_space<vmem>>, %arg6: memref<16x1xf32, #tpu.memory_space<vmem>>, %arg7: memref<1x16x16xf32, #tpu.memory_space<vmem>>) attributes {dimension_semantics = [#tpu.dimension_semantics<parallel>], iteration_bounds = array<i64: 2>, scalar_prefetch = 0 : i64, scratch_operands = 0 : i64, tpu.core_type = #tpu.core_type<tc>, window_params = [{transform_indices = @transform_0, window_bounds = array<i64: 1, 8, 256>}, {transform_indices = @transform_1, window_bounds = array<i64: 1, 16, 16>}, {pipeline_mode = #tpu.pipeline_mode<synchronous>, transform_indices = @transform_2, window_bounds = array<i64: 3, 16, 8>}, {pipeline_mode = #tpu.pipeline_mode<synchronous>, transform_indices = @transform_3, window_bounds = array<i64: 16, 1>}, {pipeline_mode = #tpu.pipeline_mode<synchronous>, transform_indices = @transform_4, window_bounds = array<i64: 16, 1>}, {pipeline_mode = #tpu.pipeline_mode<synchronous>, transform_indices = @transform_5, window_bounds = array<i64: 16, 1>}, {transform_indices = @transform_6, window_bounds = array<i64: 1, 16, 16>}]} {
    %c0 = arith.constant 0 : index
    %c0_0 = arith.constant 0 : index
    %c0_1 = arith.constant 0 : index
    %0 = vector.load %arg1[%c0, %c0_0, %c0_1] : memref<1x8x256xf32, #tpu.memory_space<vmem>>, vector<1x8x256xf32>
    %1 = vector.shape_cast %0 : vector<1x8x256xf32> to vector<8x256xf32>
    %2 = arith.truncf %1 : vector<8x256xf32> to vector<8x256xbf16>
    %cst = arith.constant 0.000000e+00 : f32
    %3 = vector.broadcast %cst : f32 to vector<16x128xf32>
    %c0_2 = arith.constant 0 : index
    %c0_3 = arith.constant 0 : index
    %c0_4 = arith.constant 0 : index
    %4 = vector.load %arg3[%c0_2, %c0_3, %c0_4] : memref<3x16x8xf32, #tpu.memory_space<vmem>>, vector<1x16x8xf32>
    %5 = vector.shape_cast %4 : vector<1x16x8xf32> to vector<16x8xf32>
    %6 = arith.truncf %5 : vector<16x8xf32> to vector<16x8xbf16>
    %7 = vector.extract_strided_slice %2 {offsets = [0, 0], sizes = [8, 128], strides = [1, 1]} : vector<8x256xbf16> to vector<8x128xbf16>
    %cst_5 = arith.constant dense<0.000000e+00> : vector<16x128xf32>
    %8 = tpu.matmul %6, %7, %cst_5 {dimension_numbers = #tpu.dot_dimension_numbers<[1], [0], [0], [1], [0, 0, 1, 1], [], []>} : vector<16x8xbf16>, vector<8x128xbf16>, vector<16x128xf32> -> vector<16x128xf32>
    %9 = arith.addf %3, %8 : vector<16x128xf32>
    %c1 = arith.constant 1 : index
    %c0_6 = arith.constant 0 : index
    %c0_7 = arith.constant 0 : index
    %10 = vector.load %arg3[%c1, %c0_6, %c0_7] : memref<3x16x8xf32, #tpu.memory_space<vmem>>, vector<1x16x8xf32>
    %11 = vector.shape_cast %10 : vector<1x16x8xf32> to vector<16x8xf32>
    %12 = arith.truncf %11 : vector<16x8xf32> to vector<16x8xbf16>
    %13 = vector.extract_strided_slice %2 {offsets = [0, 1], sizes = [8, 128], strides = [1, 1]} : vector<8x256xbf16> to vector<8x128xbf16>
    %cst_8 = arith.constant dense<0.000000e+00> : vector<16x128xf32>
    %14 = tpu.matmul %12, %13, %cst_8 {dimension_numbers = #tpu.dot_dimension_numbers<[1], [0], [0], [1], [0, 0, 1, 1], [], []>} : vector<16x8xbf16>, vector<8x128xbf16>, vector<16x128xf32> -> vector<16x128xf32>
    %15 = arith.addf %9, %14 : vector<16x128xf32>
    %c2 = arith.constant 2 : index
    %c0_9 = arith.constant 0 : index
    %c0_10 = arith.constant 0 : index
    %16 = vector.load %arg3[%c2, %c0_9, %c0_10] : memref<3x16x8xf32, #tpu.memory_space<vmem>>, vector<1x16x8xf32>
    %17 = vector.shape_cast %16 : vector<1x16x8xf32> to vector<16x8xf32>
    %18 = arith.truncf %17 : vector<16x8xf32> to vector<16x8xbf16>
    %19 = vector.extract_strided_slice %2 {offsets = [0, 2], sizes = [8, 128], strides = [1, 1]} : vector<8x256xbf16> to vector<8x128xbf16>
    %cst_11 = arith.constant dense<0.000000e+00> : vector<16x128xf32>
    %20 = tpu.matmul %18, %19, %cst_11 {dimension_numbers = #tpu.dot_dimension_numbers<[1], [0], [0], [1], [0, 0, 1, 1], [], []>} : vector<16x8xbf16>, vector<8x128xbf16>, vector<16x128xf32> -> vector<16x128xf32>
    %21 = arith.addf %15, %20 : vector<16x128xf32>
    %c0_12 = arith.constant 0 : index
    %c0_13 = arith.constant 0 : index
    %22 = vector.load %arg4[%c0_12, %c0_13] : memref<16x1xf32, #tpu.memory_space<vmem>>, vector<16x1xf32>
    %23 = vector.broadcast %22 : vector<16x1xf32> to vector<16x128xf32>
    %24 = arith.addf %21, %23 : vector<16x128xf32>
    %25 = tpu.iota {dimensions = array<i32: 1>} : vector<1x128xi32>
    %c16_i32 = arith.constant 16 : i32
    %26 = vector.broadcast %c16_i32 : i32 to vector<1x128xi32>
    %27 = arith.cmpi slt, %25, %26 : vector<1x128xi32>
    %cst_14 = arith.constant 0.000000e+00 : f32
    %28 = vector.shape_cast %27 : vector<1x128xi1> to vector<1x128xi1>
    %29 = vector.broadcast %28 : vector<1x128xi1> to vector<16x128xi1>
    %30 = vector.broadcast %cst_14 : f32 to vector<16x128xf32>
    %31 = arith.select %29, %24, %30 : vector<16x128xi1>, vector<16x128xf32>
    %32 = vector.shape_cast %31 : vector<16x128xf32> to vector<1x16x128xf32>
    %cst_15 = arith.constant dense<0.000000e+00> : vector<1xf32>
    %33 = vector.multi_reduction <add>, %32, %cst_15 [1, 2] : vector<1x16x128xf32> to vector<1xf32>
    %34 = vector.shape_cast %33 : vector<1xf32> to vector<1x1x1xf32>
    %35 = vector.extract %34[0, 0, 0] : f32 from vector<1x1x1xf32>
    %36 = arith.mulf %31, %31 : vector<16x128xf32>
    %37 = vector.shape_cast %36 : vector<16x128xf32> to vector<1x16x128xf32>
    %cst_16 = arith.constant dense<0.000000e+00> : vector<1xf32>
    %38 = vector.multi_reduction <add>, %37, %cst_16 [1, 2] : vector<1x16x128xf32> to vector<1xf32>
    %39 = vector.shape_cast %38 : vector<1xf32> to vector<1x1x1xf32>
    %40 = vector.extract %39[0, 0, 0] : f32 from vector<1x1x1xf32>
    %cst_17 = arith.constant 2.560000e+02 : f32
    %41 = arith.divf %35, %cst_17 : f32
    %cst_18 = arith.constant 2.560000e+02 : f32
    %42 = arith.divf %40, %cst_18 : f32
    %43 = arith.mulf %41, %41 : f32
    %44 = arith.subf %42, %43 : f32
    %cst_19 = arith.constant 0.000000e+00 : f32
    %45 = arith.maximumf %44, %cst_19 : f32
    %cst_20 = arith.constant 9.99999993E-9 : f32
    %46 = arith.addf %45, %cst_20 : f32
    %47 = math.rsqrt %46 : f32
    %c0_21 = arith.constant 0 : index
    %c0_22 = arith.constant 0 : index
    %48 = vector.load %arg5[%c0_21, %c0_22] : memref<16x1xf32, #tpu.memory_space<vmem>>, vector<16x1xf32>
    %49 = vector.broadcast %41 : f32 to vector<16x128xf32>
    %50 = arith.subf %24, %49 : vector<16x128xf32>
    %51 = vector.broadcast %47 : f32 to vector<16x128xf32>
    %52 = arith.mulf %50, %51 : vector<16x128xf32>
    %53 = vector.broadcast %48 : vector<16x1xf32> to vector<16x128xf32>
    %54 = arith.mulf %53, %52 : vector<16x128xf32>
    %c0_23 = arith.constant 0 : index
    %c0_24 = arith.constant 0 : index
    %55 = vector.load %arg6[%c0_23, %c0_24] : memref<16x1xf32, #tpu.memory_space<vmem>>, vector<16x1xf32>
    %56 = vector.broadcast %55 : vector<16x1xf32> to vector<16x128xf32>
    %57 = arith.addf %54, %56 : vector<16x128xf32>
    %58 = vector.extract_strided_slice %57 {offsets = [0, 0], sizes = [16, 16], strides = [1, 1]} : vector<16x128xf32> to vector<16x16xf32>
    %c0_25 = arith.constant 0 : index
    %c0_26 = arith.constant 0 : index
    %c0_27 = arith.constant 0 : index
    %59 = vector.load %arg2[%c0_25, %c0_26, %c0_27] : memref<1x16x16xf32, #tpu.memory_space<vmem>>, vector<1x16x16xf32>
    %60 = vector.shape_cast %59 : vector<1x16x16xf32> to vector<16x16xf32>
    %61 = arith.addf %58, %60 : vector<16x16xf32>
    %c0_28 = arith.constant 0 : index
    %c0_29 = arith.constant 0 : index
    %c0_30 = arith.constant 0 : index
    %62 = vector.load %arg7[%c0_28, %c0_29, %c0_30] : memref<1x16x16xf32, #tpu.memory_space<vmem>>, vector<1x16x16xf32>
    %63 = vector.shape_cast %62 : vector<1x16x16xf32> to vector<16x16xf32>
    %64 = vector.shape_cast %61 : vector<16x16xf32> to vector<1x16x16xf32>
    tpu.vector_store %arg7[%c0_28, %c0_29, %c0_30], %64 {strides = array<i32>} : memref<1x16x16xf32, #tpu.memory_space<vmem>>, vector<1x16x16xf32>,
    return
  }
  func.func @transform_0(%arg0: i32) -> (i32, i32, i32) {
    %c0_i32 = arith.constant 0 : i32
    %c0_i32_0 = arith.constant 0 : i32
    %c0_i32_1 = arith.constant 0 : i32
    return %arg0, %c0_i32, %c0_i32_0 : i32, i32, i32
  }
  func.func @transform_1(%arg0: i32) -> (i32, i32, i32) {
    %c0_i32 = arith.constant 0 : i32
    %c0_i32_0 = arith.constant 0 : i32
    %c0_i32_1 = arith.constant 0 : i32
    return %arg0, %c0_i32, %c0_i32_0 : i32, i32, i32
  }
  func.func @transform_2(%arg0: i32) -> (i32, i32, i32) {
    %c0_i32 = arith.constant 0 : i32
    %c0_i32_0 = arith.constant 0 : i32
    %c0_i32_1 = arith.constant 0 : i32
    %c0_i32_2 = arith.constant 0 : i32
    return %c0_i32, %c0_i32_0, %c0_i32_1 : i32, i32, i32
  }
  func.func @transform_3(%arg0: i32) -> (i32, i32) {
    %c0_i32 = arith.constant 0 : i32
    %c0_i32_0 = arith.constant 0 : i32
    %c0_i32_1 = arith.constant 0 : i32
    return %c0_i32, %c0_i32_0 : i32, i32
  }
  func.func @transform_4(%arg0: i32) -> (i32, i32) {
    %c0_i32 = arith.constant 0 : i32
    %c0_i32_0 = arith.constant 0 : i32
    %c0_i32_1 = arith.constant 0 : i32
    return %c0_i32, %c0_i32_0 : i32, i32
  }
  func.func @transform_5(%arg0: i32) -> (i32, i32) {
    %c0_i32 = arith.constant 0 : i32
    %c0_i32_0 = arith.constant 0 : i32
    %c0_i32_1 = arith.constant 0 : i32
    return %c0_i32, %c0_i32_0 : i32, i32
  }
  func.func @transform_6(%arg0: i32) -> (i32, i32, i32) {
    %c0_i32 = arith.constant 0 : i32
    %c0_i32_0 = arith.constant 0 : i32
    %c0_i32_1 = arith.constant 0 : i32
    return %arg0, %c0_i32, %c0_i32_0 : i32, i32, i32
  }
}

</mosaic_0001>

<llo_original>
// kernel: _lambda_.3
$region0: #{_lambda_.3}
  #allocation0 [shape = 'u32[]', space=smem, size = 0x4, offset = 0x4, fixed_abs, tag = 'smem constant byte address 0x4 - core index']
  #allocation1 [shape = 'u32[72,128]{1,0:T(1,128)}', space=vmem, size = 0x9000, scoped, tag = 'internal scratch']
  %s0 = inlined_call_operand.vmem [shape: f32[2,16,256], index: 0, kind: input, shape index: {}]
  %s1 = inlined_call_operand.vmem [shape: f32[2,8,32], index: 1, kind: input, shape index: {}]
  %s2 = inlined_call_operand.vmem [shape: f32[3,8,16], index: 2, kind: input, shape index: {}]
  %s3 = inlined_call_operand.vmem [shape: f32[8,1], index: 3, kind: input, shape index: {}]
  %s4 = inlined_call_operand.vmem [shape: f32[8,1], index: 4, kind: input, shape index: {}]
  %s5 = inlined_call_operand.vmem [shape: f32[8,1], index: 5, kind: input, shape index: {}]
  %s6 = inlined_call_operand.hbm [shape: f32[2,8,32], index: 6, kind: output, shape index: {}]
  %s7 = sld [smem:[#allocation0]]
  $region57: #{_lambda_.3} parent=0
    _
  %s9 = ssub.s32 1, %s7
  %s10 = scalar_select 0, %s9, %s7
  $region1: #{_lambda_.3} parent=0
    #allocation2 [shape = 'u8[8192]{0}', space=vmem, size = 0x2000, scoped, tag = 'output window, operand 0']
    #allocation3 [shape = 's32[2]{0}', space=sflag, size = 0x8, scoped, tag = 'scoped memory for _lambda_.3']
    %11 = vsyncpa [#allocation3], 0
    %s12 = scalar_lea.sflag [#allocation3], 1
    %13 = vsyncpa %s12, 0
    loop: start=0, step=1, limit=4
    $region2: #{_lambda_.3} parent=1 // loop_pre_header
      _
    $region3: #{_lambda_.3} parent=1 // loop_header
      %s15 = sphi 0, %s19
      %p16 = scmp.ge.s32.totalorder %s15, 4
      %s25 = sphi 0, %s27
      %s28 = sphi 0, %s25
      %s29 = sphi 0, %s28
      %s45 = sphi 0, %s29
      %s51 = sphi 0, %s53
      %s54 = sphi 0, %s51
      %s55 = sphi 0, %s54
      %s71 = sphi 0, %s55
      %s75 = sphi 0, %s75
      %s77 = sphi 0, %s75
      %s78 = sphi 0, %s77
      %s92 = sphi 0, %s78
      %s96 = sphi 0, %s96
      %s98 = sphi 0, %s96
      %s99 = sphi 0, %s98
      %s113 = sphi 0, %s99
      %s117 = sphi 0, %s117
      %s119 = sphi 0, %s117
      %s120 = sphi 0, %s119
      %s134 = sphi 0, %s120
      %s138 = sphi 0, %s138
      %s140 = sphi 0, %s138
      %s141 = sphi 0, %s140
      %s155 = sphi 0, %s141
      %s161 = sphi 0, %s163
      %s164 = sphi 0, %s161
      %s165 = sphi 0, %s164
      %s181 = sphi 0, %s165
    $region4: #{_lambda_.3} parent=1 // loop_header_branch
      %18 = sbr.rel (%p16) target = $region8
    $region5: #{_lambda_.3} parent=1 // loop_body
      %s20 = ssub.s32 %s15, 1
      %s21 = ssub.s32 %s15, 2
      %s22 = sadd.s32 %s15, 1
      %s23 = ssub.s32 %s15, %s22
      %p24 = scmp.eq.s32.totalorder %s23, 0
      %s26 = sadd.s32 %s25, 1
      %s27 = scalar_select %p24, %s25, %s26
      %p30 = pneg %p24
      %p31 = scmp.eq.s32.totalorder %s15, 1
      %p32 = por %p30, %p31
      %p33 = scmp.ne.s32.totalorder %s25, %s28
      %p34 = scmp.eq.s32.totalorder %s15, 0
      %p35 = por %p33, %p34
      %p36 = scmp.ne.s32.totalorder %s25, %s28
      %p37 = scmp.eq.s32.totalorder %s20, 1
      %p38 = por %p36, %p37
      %p39 = scmp.ne.s32.totalorder %s28, %s29
      %p40 = scmp.eq.s32.totalorder %s20, 0
      %p41 = por %p39, %p40
      %p42 = scmp.ne.s32.totalorder %s28, %s29
      %p43 = scmp.eq.s32.totalorder %s21, 1
      %p44 = por %p42, %p43
      %p46 = scmp.ne.s32.totalorder %s29, %s45
      %p47 = scmp.eq.s32.totalorder %s21, 0
      %p48 = por %p46, %p47
      %s49 = ssub.s32 %s15, %s22
      %p50 = scmp.eq.s32.totalorder %s49, 0
      %s52 = sadd.s32 %s51, 1
      %s53 = scalar_select %p50, %s51, %s52
      %p56 = pneg %p50
      %p57 = scmp.eq.s32.totalorder %s15, 1
      %p58 = por %p56, %p57
      %p59 = scmp.ne.s32.totalorder %s51, %s54
      %p60 = scmp.eq.s32.totalorder %s15, 0
      %p61 = por %p59, %p60
      %p62 = scmp.ne.s32.totalorder %s51, %s54
      %p63 = scmp.eq.s32.totalorder %s20, 1
      %p64 = por %p62, %p63
      %p65 = scmp.ne.s32.totalorder %s54, %s55
      %p66 = scmp.eq.s32.totalorder %s20, 0
      %p67 = por %p65, %p66
      %p68 = scmp.ne.s32.totalorder %s54, %s55
      %p69 = scmp.eq.s32.totalorder %s21, 1
      %p70 = por %p68, %p69
      %p72 = scmp.ne.s32.totalorder %s55, %s71
      %p73 = scmp.eq.s32.totalorder %s21, 0
      %p74 = por %p72, %p73
      %s76 = sadd.s32 %s75, 1
      %p79 = scmp.eq.s32.totalorder %s15, 1
      %p80 = scmp.ne.s32.totalorder %s75, %s77
      %p81 = scmp.eq.s32.totalorder %s15, 0
      %p82 = por %p80, %p81
      %p83 = scmp.ne.s32.totalorder %s75, %s77
      %p84 = scmp.eq.s32.totalorder %s20, 1
      %p85 = por %p83, %p84
      %p86 = scmp.ne.s32.totalorder %s77, %s78
      %p87 = scmp.eq.s32.totalorder %s20, 0
      %p88 = por %p86, %p87
      %p89 = scmp.ne.s32.totalorder %s77, %s78
      %p90 = scmp.eq.s32.totalorder %s21, 1
      %p91 = por %p89, %p90
      %p93 = scmp.ne.s32.totalorder %s78, %s92
      %p94 = scmp.eq.s32.totalorder %s21, 0
      %p95 = por %p93, %p94
      %s97 = sadd.s32 %s96, 1
      %p100 = scmp.eq.s32.totalorder %s15, 1
      %p101 = scmp.ne.s32.totalorder %s96, %s98
      %p102 = scmp.eq.s32.totalorder %s15, 0
      %p103 = por %p101, %p102
      %p104 = scmp.ne.s32.totalorder %s96, %s98
      %p105 = scmp.eq.s32.totalorder %s20, 1
      %p106 = por %p104, %p105
      %p107 = scmp.ne.s32.totalorder %s98, %s99
      %p108 = scmp.eq.s32.totalorder %s20, 0
      %p109 = por %p107, %p108
      %p110 = scmp.ne.s32.totalorder %s98, %s99
      %p111 = scmp.eq.s32.totalorder %s21, 1
      %p112 = por %p110, %p111
      %p114 = scmp.ne.s32.totalorder %s99, %s113
      %p115 = scmp.eq.s32.totalorder %s21, 0
      %p116 = por %p114, %p115
      %s118 = sadd.s32 %s117, 1
      %p121 = scmp.eq.s32.totalorder %s15, 1
      %p122 = scmp.ne.s32.totalorder %s117, %s119
      %p123 = scmp.eq.s32.totalorder %s15, 0
      %p124 = por %p122, %p123
      %p125 = scmp.ne.s32.totalorder %s117, %s119
      %p126 = scmp.eq.s32.totalorder %s20, 1
      %p127 = por %p125, %p126
      %p128 = scmp.ne.s32.totalorder %s119, %s120
      %p129 = scmp.eq.s32.totalorder %s20, 0
      %p130 = por %p128, %p129
      %p131 = scmp.ne.s32.totalorder %s119, %s120
      %p132 = scmp.eq.s32.totalorder %s21, 1
      %p133 = por %p131, %p132
      %p135 = scmp.ne.s32.totalorder %s120, %s134
      %p136 = scmp.eq.s32.totalorder %s21, 0
      %p137 = por %p135, %p136
      %s139 = sadd.s32 %s138, 1
      %p142 = scmp.eq.s32.totalorder %s15, 1
      %p143 = scmp.ne.s32.totalorder %s138, %s140
      %p144 = scmp.eq.s32.totalorder %s15, 0
      %p145 = por %p143, %p144
      %p146 = scmp.ne.s32.totalorder %s138, %s140
      %p147 = scmp.eq.s32.totalorder %s20, 1
      %p148 = por %p146, %p147
      %p149 = scmp.ne.s32.totalorder %s140, %s141
      %p150 = scmp.eq.s32.totalorder %s20, 0
      %p151 = por %p149, %p150
      %p152 = scmp.ne.s32.totalorder %s140, %s141
      %p153 = scmp.eq.s32.totalorder %s21, 1
      %p154 = por %p152, %p153
      %p156 = scmp.ne.s32.totalorder %s141, %s155
      %p157 = scmp.eq.s32.totalorder %s21, 0
      %p158 = por %p156, %p157
      %s159 = ssub.s32 %s15, %s22
      %p160 = scmp.eq.s32.totalorder %s159, 0
      %s162 = sadd.s32 %s161, 1
      %s163 = scalar_select %p160, %s161, %s162
      %p166 = pneg %p160
      %p167 = scmp.eq.s32.totalorder %s15, 1
      %p168 = por %p166, %p167
      %p169 = scmp.ne.s32.totalorder %s161, %s164
      %p170 = scmp.eq.s32.totalorder %s15, 0
      %p171 = por %p169, %p170
      %p172 = scmp.ne.s32.totalorder %s161, %s164
      %p173 = scmp.eq.s32.totalorder %s20, 1
      %p174 = por %p172, %p173
      %p175 = scmp.ne.s32.totalorder %s164, %s165
      %p176 = scmp.eq.s32.totalorder %s20, 0
      %p177 = por %p175, %p176
      %p178 = scmp.ne.s32.totalorder %s164, %s165
      %p179 = scmp.eq.s32.totalorder %s21, 1
      %p180 = por %p178, %p179
      %p182 = scmp.ne.s32.totalorder %s165, %s181
      %p183 = scmp.eq.s32.totalorder %s21, 0
      %p184 = por %p182, %p183
      %p185 = scmp.le.s32.totalorder 1, %s15
      %p186 = scmp.lt.s32.totalorder %s15, 3
      %p187 = pnand %p185, %p186
      %p188 = pneg %p187
      // Predicated region
      $region9: #{_lambda_.3} parent=5 // pred_check
        _
      $region10: #{_lambda_.3} parent=5 // pred_check_branch
        %190 = sbr.rel (%p187) target = $region12
      $region11: #{_lambda_.3} parent=5 // pred_region
        %s191 = ssub.s32 %s15, 1
        // Predicated region
        $region13: #{_lambda_.3} parent=11 // pred_check
          %p192 = pneg %p88
        $region14: #{_lambda_.3} parent=11 // pred_check_branch
          %194 = sbr.rel (%p192) target = $region16
        $region15: #{_lambda_.3} parent=11 // pred_region
          _
        $region16: #{_lambda_.3} parent=11 // pred_fallthru
          _
        // Predicated region
        $region17: #{_lambda_.3} parent=11 // pred_check
          %p195 = pneg %p109
        $region18: #{_lambda_.3} parent=11 // pred_check_branch
          %197 = sbr.rel (%p195) target = $region20
        $region19: #{_lambda_.3} parent=11 // pred_region
          _
        $region20: #{_lambda_.3} parent=11 // pred_fallthru
          _
        // Predicated region
        $region21: #{_lambda_.3} parent=11 // pred_check
          %p198 = pneg %p130
        $region22: #{_lambda_.3} parent=11 // pred_check_branch
          %200 = sbr.rel (%p198) target = $region24
        $region23: #{_lambda_.3} parent=11 // pred_region
          _
        $region24: #{_lambda_.3} parent=11 // pred_fallthru
          _
        // Predicated region
        $region25: #{_lambda_.3} parent=11 // pred_check
          %p201 = pneg %p151
        $region26: #{_lambda_.3} parent=11 // pred_check_branch
          %203 = sbr.rel (%p201) target = $region28
        $region27: #{_lambda_.3} parent=11 // pred_region
          _
        $region28: #{_lambda_.3} parent=11 // pred_fallthru
          _
      $region12: #{_lambda_.3} parent=5 // pred_fallthru
        _
      %p204 = scmp.lt.s32.totalorder %s15, 2
      // Predicated region
      $region29: #{_lambda_.3} parent=5 // pred_check
        %p205 = pneg %p204
      $region30: #{_lambda_.3} parent=5 // pred_check_branch
        %207 = sbr.rel (%p205) target = $region32
      $region31: #{_lambda_.3} parent=5 // pred_region
        // Predicated region
        $region33: #{_lambda_.3} parent=31 // pred_check
          %p208 = pneg %p35
        $region34: #{_lambda_.3} parent=31 // pred_check_branch
          %210 = sbr.rel (%p208) target = $region36
        $region35: #{_lambda_.3} parent=31 // pred_region
          %p211 = scmp.lt.s32.totalorder %s15, 1
          %s212 = scalar_select %p211, %s15, 1
          %s213 = smul.addr %s212, 4
          %s214 = smul.addr %s213, 8
          %s215 = scalar_lea.vmem %s0, %s214
        $region36: #{_lambda_.3} parent=31 // pred_fallthru
          _
        // Predicated region
        $region37: #{_lambda_.3} parent=31 // pred_check
          %p216 = pneg %p61
        $region38: #{_lambda_.3} parent=31 // pred_check_branch
          %218 = sbr.rel (%p216) target = $region40
        $region39: #{_lambda_.3} parent=31 // pred_region
          %p219 = scmp.lt.s32.totalorder %s15, 1
          %s220 = scalar_select %p219, %s15, 1
          %s221 = smul.addr %s220, 8
          %s222 = scalar_lea.vmem %s1, %s221
        $region40: #{_lambda_.3} parent=31 // pred_fallthru
          _
      $region32: #{_lambda_.3} parent=5 // pred_fallthru
        _
      %p223 = scmp.le.s32.totalorder 1, %s15
      %p224 = scmp.lt.s32.totalorder %s15, 3
      %p225 = pnand %p223, %p224
      %p226 = pneg %p225
      // Predicated region
      $region41: #{_lambda_.3} parent=5 // pred_check
        _
      $region42: #{_lambda_.3} parent=5 // pred_check_branch
        %228 = sbr.rel (%p225) target = $region44
      $region43: #{_lambda_.3} parent=5 // pred_region
        %s229 = ssub.s32 %s15, 1
        %p230 = scmp.lt.s32.totalorder %s20, 1
        %s231 = scalar_select %p230, %s20, 1
        %s232 = smul.addr %s231, 4
        %s233 = smul.addr %s232, 8
        %s234 = scalar_lea.vmem %s0, %s233
        %p235 = pneg %p41
        %p236 = pneg %p38
        %p237 = scmp.lt.s32.totalorder %s20, 1
        %s238 = scalar_select %p237, %s20, 1
        %s239 = smul.addr %s238, 8
        %s240 = scalar_lea.vmem %s1, %s239
        %p241 = pneg %p67
        %p242 = pneg %p64
        %p243 = pneg %p88
        %p244 = pneg %p85
        %p245 = pneg %p109
        %p246 = pneg %p106
        %p247 = pneg %p130
        %p248 = pneg %p127
        %p249 = pneg %p151
        %p250 = pneg %p148
        %p251 = pneg %p177
        %p252 = pneg %p174
        %s253 = sand.u32 %s164, 1
        %s254 = scalar_lea.sflag [#allocation3], %s253
        %s255 = sand.u32 %s164, 1
        %s256 = smul.addr %s255, 8
        %s257 = scalar_lea.vmem [#allocation2], %s256
        %p258 = scmp.lt.s32.totalorder %s20, 1
        %s259 = scalar_select %p258, %s20, 1
        %s260 = smul.addr %s259, 4
        %s261 = smul.addr %s260, 8
        %s262 = scalar_lea.vmem %s0, %s261
        %p263 = scmp.lt.s32.totalorder %s20, 1
        %s264 = scalar_select %p263, %s20, 1
        %s265 = smul.addr %s264, 8
        %s266 = scalar_lea.vmem %s1, %s265
        %v268 = vld [vmem:[%s262] sm:$0xff]
        %v269 = vld [vmem:[%s262 + $0x8] sm:$0xff]
        %v270 = vld [vmem:[%s262 + $0x10] sm:$0xff]
        %v271 = vld [vmem:[%s262 + $0x18] sm:$0xff]
        %v272 = vpack.c.bf16 %v269, %v268
        %v273 = vpack.c.bf16 %v271, %v270
        %v274 = vld [vmem:[%s2] sm:$0xff]
        %v275 = vpack.c.bf16 %v274, %v274
        %s276 = scalar_lea.vmem %s2, 8
        %v277 = vld [vmem:[%s276] sm:$0xff]
        %v278 = vpack.c.bf16 %v277, %v277
        %v281 = vunpack.c.l.b16 %v272
        %v282 = vunpack.c.h.b16 %v272
        %v283 = vunpack.c.l.b16 %v273
        %v284 = vunpack.c.h.b16 %v273
        %v285 = vpack.c.b16 %v283, %v281
        %v286 = vpack.c.b16 %v284, %v282
        %287 = vrot.lane.b32.xlu0 %v285, 127
        %v288 = vpop.permute.xlu0 %287
        %289 = vrot.lane.b32.xlu0 %v286, 127
        %v290 = vpop.permute.xlu0 %289
        %vm291 = vcmask 1039360
        %v292 = vsel %vm291, %v288, %v290
        %vm294 = vcmask 130048
        %v296 = vsel %vm294, %v278, 0
        %298 = vmatpush.bf16.msra.mxu0 0
        %299 = vmatpush.bf16.msra.mxu0 0
        %300 = vmatpush.bf16.msra.mxu0 0
        %301 = vmatpush.bf16.msra.mxu0 0
        %302 = vmatpush.bf16.msra.mxu0 0
        %303 = vmatpush.bf16.msra.mxu0 0
        %304 = vmatpush.bf16.msra.mxu0 0
        %305 = vmatpush.bf16.msra.mxu0 %v292
        %306 = vmatmul.bf16.gmra.mxu0 %v296
        %v307 = vpop.f32.mrf.mxu0
        %v308 = vadd.f32 0.0, %v307
        %v309 = vpop.f32.mrf.mxu0
        %310 = vdwg.mxu0
        %v313 = vsel %vm294, %v275, 0
        %315 = vmatpush.bf16.msra.mxu0 0
        %316 = vmatpush.bf16.msra.mxu0 0
        %317 = vmatpush.bf16.msra.mxu0 0
        %318 = vmatpush.bf16.msra.mxu0 0
        %319 = vmatpush.bf16.msra.mxu0 0
        %320 = vmatpush.bf16.msra.mxu0 0
        %321 = vmatpush.bf16.msra.mxu0 0
        %322 = vmatpush.bf16.msra.mxu0 %v285
        %323 = vmatmul.bf16.gmra.mxu0 %v313
        %v324 = vpop.f32.mrf.mxu0
        %v325 = vadd.f32 %v308, %v324
        %v326 = vpop.f32.mrf.mxu0
        %327 = vdwg.mxu0
        %s328 = scalar_lea.vmem %s2, 16
        %v329 = vld [vmem:[%s328] sm:$0xff]
        %v330 = vpack.c.bf16 %v329, %v329
        %331 = vrot.lane.b32.xlu0 %v285, 126
        %v332 = vpop.permute.xlu0 %331
        %333 = vrot.lane.b32.xlu0 %v286, 126
        %v334 = vpop.permute.xlu0 %333
        %vm335 = vcmask 1031168
        %v336 = vsel %vm335, %v332, %v334
        %v339 = vsel %vm294, %v330, 0
        %341 = vmatpush.bf16.msra.mxu0 0
        %342 = vmatpush.bf16.msra.mxu0 0
        %343 = vmatpush.bf16.msra.mxu0 0
        %344 = vmatpush.bf16.msra.mxu0 0
        %345 = vmatpush.bf16.msra.mxu0 0
        %346 = vmatpush.bf16.msra.mxu0 0
        %347 = vmatpush.bf16.msra.mxu0 0
        %348 = vmatpush.bf16.msra.mxu0 %v336
        %349 = vmatmul.bf16.gmra.mxu0 %v339
        %v350 = vpop.f32.mrf.mxu0
        %v351 = vadd.f32 0.0, %v350
        %v352 = vpop.f32.mrf.mxu0
        %353 = vdwg.mxu0
        %v354 = vadd.f32 %v325, %v351
        %v355 = vld [vmem:[%s3] sm:$0xff]
        %357 = vset.pattern.permute.xlu0 0
        %358 = vperm.xlu0 %357, %v355
        %v359 = vpop.permute.xlu0 %358
        %v361 = vadd.f32 %v354, %v359
        %v362 = vlaneseq
        %v363 = vand.u32 %v362, 127
        %vm364 = vcmp.lt.s32.totalorder %v363, 32
        %v365 = vsel %vm364, 1, 0
        %vm366 = vcmp.eq.s32.totalorder %v365, 1
        %v367 = vsel %vm366, %v361, 0.0
        %368 = vadd.xlane.f32.xlu0 %v367
        %v369 = vpop.xlane.xlu0 %368
        %v370 = vrot.slane %v369, 4
        %v371 = vadd.f32 %v369, %v370
        %v372 = vrot.slane %v371, 2
        %v373 = vadd.f32 %v371, %v372
        %v374 = vrot.slane %v373, 1
        %v375 = vadd.f32 %v373, %v374
        %s376 = vtos %v375
        %v377 = vmul.f32 %v367, %v367
        %378 = vadd.xlane.f32.xlu0 %v377
        %v379 = vpop.xlane.xlu0 %378
        %v380 = vrot.slane %v379, 4
        %v381 = vadd.f32 %v379, %v380
        %v382 = vrot.slane %v381, 2
        %v383 = vadd.f32 %v381, %v382
        %v384 = vrot.slane %v383, 1
        %v385 = vadd.f32 %v383, %v384
        %s386 = vtos %v385
        %v387 = vrcp.pop 256.0
        %v388 = vmul.f32 256.0, %v387
        %v389 = vsub.f32 1.0, %v388
        %v390 = vmul.f32 %v387, %v389
        %v391 = vadd.f32 %v387, %v390
        %vm392 = vweird.f32 %v387
        %v393 = vsel %vm392, %v387, %v391
        %s394 = vtos %v393
        %s395 = smul.f32 %s376, %s394
        %v396 = vrcp.pop 256.0
        %v397 = vmul.f32 256.0, %v396
        %v398 = vsub.f32 1.0, %v397
        %v399 = vmul.f32 %v396, %v398
        %v400 = vadd.f32 %v396, %v399
        %vm401 = vweird.f32 %v396
        %v402 = vsel %vm401, %v396, %v400
        %s403 = vtos %v402
        %s404 = smul.f32 %s386, %s403
        %s405 = smul.f32 %s395, %s395
        %s406 = ssub.f32 %s404, %s405
        %s407 = smax.f32 %s406, 0.0
        %s408 = sadd.f32 %s407, 1e-08
        %v409 = vstv %s408
        %v410 = vrsqrt.pop %v409
        %v411 = vmul.f32 %v410, %v409
        %v412 = vmul.f32 %v411, %v410
        %v413 = vmul.f32 0.5, %v412
        %v414 = vsub.f32 1.5, %v413
        %v415 = vmul.f32 %v410, %v414
        %vm416 = vweird.f32 %v409
        %vm417 = vweird.f32 %v410
        %vm418 = vmor %vm416, %vm417
        %v419 = vsel %vm418, %v410, %v415
        %s420 = vtos %v419
        %v421 = vld [vmem:[%s4] sm:$0xff]
        %v422 = vstv %s395
        %v423 = vsub.f32 %v361, %v422
        %v424 = vstv %s420
        %v425 = vmul.f32 %v423, %v424
        %427 = vset.pattern.permute.xlu0 0
        %428 = vperm.xlu0 %427, %v421
        %v429 = vpop.permute.xlu0 %428
        %v431 = vmul.f32 %v429, %v425
        %v432 = vld [vmem:[%s5] sm:$0xff]
        %434 = vset.pattern.permute.xlu0 0
        %435 = vperm.xlu0 %434, %v432
        %v436 = vpop.permute.xlu0 %435
        %v438 = vadd.f32 %v431, %v436
        %v439 = vld [vmem:[%s266] sm:$0xff]
        %v440 = vadd.f32 %v438, %v439
        %vm441 = vcmask 261120
        %442 = vst.msk [vmem:[%s257] sm:$0xff] %vm441, %v440
        %s443 = sand.u32 %s164, 1
        %s444 = scalar_lea.sflag [#allocation3], %s443
        %s445 = sand.u32 %s164, 1
        %s446 = smul.addr %s445, 8
        %s447 = scalar_lea.vmem [#allocation2], %s446
        // Predicated region
        $region45: #{_lambda_.3} parent=43 // pred_check
          %p448 = pneg %p174
        $region46: #{_lambda_.3} parent=43 // pred_check_branch
          %450 = sbr.rel (%p448) target = $region48
        $region47: #{_lambda_.3} parent=43 // pred_region
          %452 = vsyncadd %s444, 0
          %s453 = smul.addr %s20, 8
          %s454 = scalar_lea.hbm %s6, %s453
          %s456 = sshll.u32 %s447, 4
          %s457 = int_to_ptr.vmem [resolvable:$true] %s456
          %s458 = sshll.u32 %s454, 4
          %s459 = int_to_ptr.hbm [resolvable:$true] %s458
          %461 = dma.vmem_to_hbm [thread:$0]  %s457, 128, %s459, %s444
        $region48: #{_lambda_.3} parent=43 // pred_fallthru
          _
      $region44: #{_lambda_.3} parent=5 // pred_fallthru
        _
      %p462 = scmp.le.s32.totalorder 2, %s15
      // Predicated region
      $region49: #{_lambda_.3} parent=5 // pred_check
        %p463 = pneg %p462
      $region50: #{_lambda_.3} parent=5 // pred_check_branch
        %465 = sbr.rel (%p463) target = $region52
      $region51: #{_lambda_.3} parent=5 // pred_region
        %s466 = ssub.s32 %s15, 2
        // Predicated region
        $region53: #{_lambda_.3} parent=51 // pred_check
          %p467 = pneg %p180
        $region54: #{_lambda_.3} parent=51 // pred_check_branch
          %469 = sbr.rel (%p467) target = $region56
        $region55: #{_lambda_.3} parent=51 // pred_region
          %s470 = sand.u32 %s165, 1
          %s471 = scalar_lea.sflag [#allocation3], %s470
          %s472 = sand.u32 %s165, 1
          %s473 = smul.addr %s472, 8
          %s474 = scalar_lea.vmem [#allocation2], %s473
          %476 = dma.done %s471, 128
        $region56: #{_lambda_.3} parent=51 // pred_fallthru
          _
      $region52: #{_lambda_.3} parent=5 // pred_fallthru
        _
    $region6: #{_lambda_.3} parent=1 // loop_footer
      %s19 = sadd.s32 1, %s15
    $region7: #{_lambda_.3} parent=1 // loop_footer_branch
      %14 = sbr.rel target = $region3
    $region8: #{_lambda_.3} parent=1 // loop_exit
      _
    %477 = vsyncpa [#allocation3], 1
    %s478 = scalar_lea.sflag [#allocation3], 1
    %479 = vsyncpa %s478, 1

// kernel: _lambda_.2
$region0: #{_lambda_.2}
  #allocation0 [shape = 'u32[]', space=smem, size = 0x4, offset = 0x4, fixed_abs, tag = 'smem constant byte address 0x4 - core index']
  #allocation1 [shape = 'u32[72,128]{1,0:T(1,128)}', space=vmem, size = 0x9000, scoped, tag = 'internal scratch']
  %s0 = inlined_call_operand.vmem [shape: f32[2,8,256], index: 0, kind: input, shape index: {}]
  %s1 = inlined_call_operand.vmem [shape: f32[2,16,16], index: 1, kind: input, shape index: {}]
  %s2 = inlined_call_operand.vmem [shape: f32[3,16,8], index: 2, kind: input, shape index: {}]
  %s3 = inlined_call_operand.vmem [shape: f32[16,1], index: 3, kind: input, shape index: {}]
  %s4 = inlined_call_operand.vmem [shape: f32[16,1], index: 4, kind: input, shape index: {}]
  %s5 = inlined_call_operand.vmem [shape: f32[16,1], index: 5, kind: input, shape index: {}]
  %s6 = inlined_call_operand.hbm [shape: f32[2,16,16], index: 6, kind: output, shape index: {}]
  %s7 = sld [smem:[#allocation0]]
  $region57: #{_lambda_.2} parent=0
    _
  %s9 = ssub.s32 1, %s7
  %s10 = scalar_select 0, %s9, %s7
  $region1: #{_lambda_.2} parent=0
    #allocation2 [shape = 'u8[16384]{0}', space=vmem, size = 0x4000, scoped, tag = 'output window, operand 0']
    #allocation3 [shape = 's32[2]{0}', space=sflag, size = 0x8, scoped, tag = 'scoped memory for _lambda_.2']
    %11 = vsyncpa [#allocation3], 0
    %s12 = scalar_lea.sflag [#allocation3], 1
    %13 = vsyncpa %s12, 0
    loop: start=0, step=1, limit=4
    $region2: #{_lambda_.2} parent=1 // loop_pre_header
      _
    $region3: #{_lambda_.2} parent=1 // loop_header
      %s15 = sphi 0, %s19
      %p16 = scmp.ge.s32.totalorder %s15, 4
      %s25 = sphi 0, %s27
      %s28 = sphi 0, %s25
      %s29 = sphi 0, %s28
      %s45 = sphi 0, %s29
      %s51 = sphi 0, %s53
      %s54 = sphi 0, %s51
      %s55 = sphi 0, %s54
      %s71 = sphi 0, %s55
      %s75 = sphi 0, %s75
      %s77 = sphi 0, %s75
      %s78 = sphi 0, %s77
      %s92 = sphi 0, %s78
      %s96 = sphi 0, %s96
      %s98 = sphi 0, %s96
      %s99 = sphi 0, %s98
      %s113 = sphi 0, %s99
      %s117 = sphi 0, %s117
      %s119 = sphi 0, %s117
      %s120 = sphi 0, %s119
      %s134 = sphi 0, %s120
      %s138 = sphi 0, %s138
      %s140 = sphi 0, %s138
      %s141 = sphi 0, %s140
      %s155 = sphi 0, %s141
      %s161 = sphi 0, %s163
      %s164 = sphi 0, %s161
      %s165 = sphi 0, %s164
      %s181 = sphi 0, %s165
    $region4: #{_lambda_.2} parent=1 // loop_header_branch
      %18 = sbr.rel (%p16) target = $region8
    $region5: #{_lambda_.2} parent=1 // loop_body
      %s20 = ssub.s32 %s15, 1
      %s21 = ssub.s32 %s15, 2
      %s22 = sadd.s32 %s15, 1
      %s23 = ssub.s32 %s15, %s22
      %p24 = scmp.eq.s32.totalorder %s23, 0
      %s26 = sadd.s32 %s25, 1
      %s27 = scalar_select %p24, %s25, %s26
      %p30 = pneg %p24
      %p31 = scmp.eq.s32.totalorder %s15, 1
      %p32 = por %p30, %p31
      %p33 = scmp.ne.s32.totalorder %s25, %s28
      %p34 = scmp.eq.s32.totalorder %s15, 0
      %p35 = por %p33, %p34
      %p36 = scmp.ne.s32.totalorder %s25, %s28
      %p37 = scmp.eq.s32.totalorder %s20, 1
      %p38 = por %p36, %p37
      %p39 = scmp.ne.s32.totalorder %s28, %s29
      %p40 = scmp.eq.s32.totalorder %s20, 0
      %p41 = por %p39, %p40
      %p42 = scmp.ne.s32.totalorder %s28, %s29
      %p43 = scmp.eq.s32.totalorder %s21, 1
      %p44 = por %p42, %p43
      %p46 = scmp.ne.s32.totalorder %s29, %s45
      %p47 = scmp.eq.s32.totalorder %s21, 0
      %p48 = por %p46, %p47
      %s49 = ssub.s32 %s15, %s22
      %p50 = scmp.eq.s32.totalorder %s49, 0
      %s52 = sadd.s32 %s51, 1
      %s53 = scalar_select %p50, %s51, %s52
      %p56 = pneg %p50
      %p57 = scmp.eq.s32.totalorder %s15, 1
      %p58 = por %p56, %p57
      %p59 = scmp.ne.s32.totalorder %s51, %s54
      %p60 = scmp.eq.s32.totalorder %s15, 0
      %p61 = por %p59, %p60
      %p62 = scmp.ne.s32.totalorder %s51, %s54
      %p63 = scmp.eq.s32.totalorder %s20, 1
      %p64 = por %p62, %p63
      %p65 = scmp.ne.s32.totalorder %s54, %s55
      %p66 = scmp.eq.s32.totalorder %s20, 0
      %p67 = por %p65, %p66
      %p68 = scmp.ne.s32.totalorder %s54, %s55
      %p69 = scmp.eq.s32.totalorder %s21, 1
      %p70 = por %p68, %p69
      %p72 = scmp.ne.s32.totalorder %s55, %s71
      %p73 = scmp.eq.s32.totalorder %s21, 0
      %p74 = por %p72, %p73
      %s76 = sadd.s32 %s75, 1
      %p79 = scmp.eq.s32.totalorder %s15, 1
      %p80 = scmp.ne.s32.totalorder %s75, %s77
      %p81 = scmp.eq.s32.totalorder %s15, 0
      %p82 = por %p80, %p81
      %p83 = scmp.ne.s32.totalorder %s75, %s77
      %p84 = scmp.eq.s32.totalorder %s20, 1
      %p85 = por %p83, %p84
      %p86 = scmp.ne.s32.totalorder %s77, %s78
      %p87 = scmp.eq.s32.totalorder %s20, 0
      %p88 = por %p86, %p87
      %p89 = scmp.ne.s32.totalorder %s77, %s78
      %p90 = scmp.eq.s32.totalorder %s21, 1
      %p91 = por %p89, %p90
      %p93 = scmp.ne.s32.totalorder %s78, %s92
      %p94 = scmp.eq.s32.totalorder %s21, 0
      %p95 = por %p93, %p94
      %s97 = sadd.s32 %s96, 1
      %p100 = scmp.eq.s32.totalorder %s15, 1
      %p101 = scmp.ne.s32.totalorder %s96, %s98
      %p102 = scmp.eq.s32.totalorder %s15, 0
      %p103 = por %p101, %p102
      %p104 = scmp.ne.s32.totalorder %s96, %s98
      %p105 = scmp.eq.s32.totalorder %s20, 1
      %p106 = por %p104, %p105
      %p107 = scmp.ne.s32.totalorder %s98, %s99
      %p108 = scmp.eq.s32.totalorder %s20, 0
      %p109 = por %p107, %p108
      %p110 = scmp.ne.s32.totalorder %s98, %s99
      %p111 = scmp.eq.s32.totalorder %s21, 1
      %p112 = por %p110, %p111
      %p114 = scmp.ne.s32.totalorder %s99, %s113
      %p115 = scmp.eq.s32.totalorder %s21, 0
      %p116 = por %p114, %p115
      %s118 = sadd.s32 %s117, 1
      %p121 = scmp.eq.s32.totalorder %s15, 1
      %p122 = scmp.ne.s32.totalorder %s117, %s119
      %p123 = scmp.eq.s32.totalorder %s15, 0
      %p124 = por %p122, %p123
      %p125 = scmp.ne.s32.totalorder %s117, %s119
      %p126 = scmp.eq.s32.totalorder %s20, 1
      %p127 = por %p125, %p126
      %p128 = scmp.ne.s32.totalorder %s119, %s120
      %p129 = scmp.eq.s32.totalorder %s20, 0
      %p130 = por %p128, %p129
      %p131 = scmp.ne.s32.totalorder %s119, %s120
      %p132 = scmp.eq.s32.totalorder %s21, 1
      %p133 = por %p131, %p132
      %p135 = scmp.ne.s32.totalorder %s120, %s134
      %p136 = scmp.eq.s32.totalorder %s21, 0
      %p137 = por %p135, %p136
      %s139 = sadd.s32 %s138, 1
      %p142 = scmp.eq.s32.totalorder %s15, 1
      %p143 = scmp.ne.s32.totalorder %s138, %s140
      %p144 = scmp.eq.s32.totalorder %s15, 0
      %p145 = por %p143, %p144
      %p146 = scmp.ne.s32.totalorder %s138, %s140
      %p147 = scmp.eq.s32.totalorder %s20, 1
      %p148 = por %p146, %p147
      %p149 = scmp.ne.s32.totalorder %s140, %s141
      %p150 = scmp.eq.s32.totalorder %s20, 0
      %p151 = por %p149, %p150
      %p152 = scmp.ne.s32.totalorder %s140, %s141
      %p153 = scmp.eq.s32.totalorder %s21, 1
      %p154 = por %p152, %p153
      %p156 = scmp.ne.s32.totalorder %s141, %s155
      %p157 = scmp.eq.s32.totalorder %s21, 0
      %p158 = por %p156, %p157
      %s159 = ssub.s32 %s15, %s22
      %p160 = scmp.eq.s32.totalorder %s159, 0
      %s162 = sadd.s32 %s161, 1
      %s163 = scalar_select %p160, %s161, %s162
      %p166 = pneg %p160
      %p167 = scmp.eq.s32.totalorder %s15, 1
      %p168 = por %p166, %p167
      %p169 = scmp.ne.s32.totalorder %s161, %s164
      %p170 = scmp.eq.s32.totalorder %s15, 0
      %p171 = por %p169, %p170
      %p172 = scmp.ne.s32.totalorder %s161, %s164
      %p173 = scmp.eq.s32.totalorder %s20, 1
      %p174 = por %p172, %p173
      %p175 = scmp.ne.s32.totalorder %s164, %s165
      %p176 = scmp.eq.s32.totalorder %s20, 0
      %p177 = por %p175, %p176
      %p178 = scmp.ne.s32.totalorder %s164, %s165
      %p179 = scmp.eq.s32.totalorder %s21, 1
      %p180 = por %p178, %p179
      %p182 = scmp.ne.s32.totalorder %s165, %s181
      %p183 = scmp.eq.s32.totalorder %s21, 0
      %p184 = por %p182, %p183
      %p185 = scmp.le.s32.totalorder 1, %s15
      %p186 = scmp.lt.s32.totalorder %s15, 3
      %p187 = pnand %p185, %p186
      %p188 = pneg %p187
      // Predicated region
      $region9: #{_lambda_.2} parent=5 // pred_check
        _
      $region10: #{_lambda_.2} parent=5 // pred_check_branch
        %190 = sbr.rel (%p187) target = $region12
      $region11: #{_lambda_.2} parent=5 // pred_region
        %s191 = ssub.s32 %s15, 1
        // Predicated region
        $region13: #{_lambda_.2} parent=11 // pred_check
          %p192 = pneg %p88
        $region14: #{_lambda_.2} parent=11 // pred_check_branch
          %194 = sbr.rel (%p192) target = $region16
        $region15: #{_lambda_.2} parent=11 // pred_region
          _
        $region16: #{_lambda_.2} parent=11 // pred_fallthru
          _
        // Predicated region
        $region17: #{_lambda_.2} parent=11 // pred_check
          %p195 = pneg %p109
        $region18: #{_lambda_.2} parent=11 // pred_check_branch
          %197 = sbr.rel (%p195) target = $region20
        $region19: #{_lambda_.2} parent=11 // pred_region
          _
        $region20: #{_lambda_.2} parent=11 // pred_fallthru
          _
        // Predicated region
        $region21: #{_lambda_.2} parent=11 // pred_check
          %p198 = pneg %p130
        $region22: #{_lambda_.2} parent=11 // pred_check_branch
          %200 = sbr.rel (%p198) target = $region24
        $region23: #{_lambda_.2} parent=11 // pred_region
          _
        $region24: #{_lambda_.2} parent=11 // pred_fallthru
          _
        // Predicated region
        $region25: #{_lambda_.2} parent=11 // pred_check
          %p201 = pneg %p151
        $region26: #{_lambda_.2} parent=11 // pred_check_branch
          %203 = sbr.rel (%p201) target = $region28
        $region27: #{_lambda_.2} parent=11 // pred_region
          _
        $region28: #{_lambda_.2} parent=11 // pred_fallthru
          _
      $region12: #{_lambda_.2} parent=5 // pred_fallthru
        _
      %p204 = scmp.lt.s32.totalorder %s15, 2
      // Predicated region
      $region29: #{_lambda_.2} parent=5 // pred_check
        %p205 = pneg %p204
      $region30: #{_lambda_.2} parent=5 // pred_check_branch
        %207 = sbr.rel (%p205) target = $region32
      $region31: #{_lambda_.2} parent=5 // pred_region
        // Predicated region
        $region33: #{_lambda_.2} parent=31 // pred_check
          %p208 = pneg %p35
        $region34: #{_lambda_.2} parent=31 // pred_check_branch
          %210 = sbr.rel (%p208) target = $region36
        $region35: #{_lambda_.2} parent=31 // pred_region
          %p211 = scmp.lt.s32.totalorder %s15, 1
          %s212 = scalar_select %p211, %s15, 1
          %s213 = smul.addr %s212, 2
          %s214 = smul.addr %s213, 8
          %s215 = scalar_lea.vmem %s0, %s214
        $region36: #{_lambda_.2} parent=31 // pred_fallthru
          _
        // Predicated region
        $region37: #{_lambda_.2} parent=31 // pred_check
          %p216 = pneg %p61
        $region38: #{_lambda_.2} parent=31 // pred_check_branch
          %218 = sbr.rel (%p216) target = $region40
        $region39: #{_lambda_.2} parent=31 // pred_region
          %p219 = scmp.lt.s32.totalorder %s15, 1
          %s220 = scalar_select %p219, %s15, 1
          %s221 = smul.addr %s220, 2
          %s222 = smul.addr %s221, 8
          %s223 = scalar_lea.vmem %s1, %s222
        $region40: #{_lambda_.2} parent=31 // pred_fallthru
          _
      $region32: #{_lambda_.2} parent=5 // pred_fallthru
        _
      %p224 = scmp.le.s32.totalorder 1, %s15
      %p225 = scmp.lt.s32.totalorder %s15, 3
      %p226 = pnand %p224, %p225
      %p227 = pneg %p226
      // Predicated region
      $region41: #{_lambda_.2} parent=5 // pred_check
        _
      $region42: #{_lambda_.2} parent=5 // pred_check_branch
        %229 = sbr.rel (%p226) target = $region44
      $region43: #{_lambda_.2} parent=5 // pred_region
        %s230 = ssub.s32 %s15, 1
        %p231 = scmp.lt.s32.totalorder %s20, 1
        %s232 = scalar_select %p231, %s20, 1
        %s233 = smul.addr %s232, 2
        %s234 = smul.addr %s233, 8
        %s235 = scalar_lea.vmem %s0, %s234
        %p236 = pneg %p41
        %p237 = pneg %p38
        %p238 = scmp.lt.s32.totalorder %s20, 1
        %s239 = scalar_select %p238, %s20, 1
        %s240 = smul.addr %s239, 2
        %s241 = smul.addr %s240, 8
        %s242 = scalar_lea.vmem %s1, %s241
        %p243 = pneg %p67
        %p244 = pneg %p64
        %p245 = pneg %p88
        %p246 = pneg %p85
        %p247 = pneg %p109
        %p248 = pneg %p106
        %p249 = pneg %p130
        %p250 = pneg %p127
        %p251 = pneg %p151
        %p252 = pneg %p148
        %p253 = pneg %p177
        %p254 = pneg %p174
        %s255 = sand.u32 %s164, 1
        %s256 = scalar_lea.sflag [#allocation3], %s255
        %s257 = sand.u32 %s164, 1
        %s258 = smul.addr %s257, 16
        %s259 = scalar_lea.vmem [#allocation2], %s258
        %p260 = scmp.lt.s32.totalorder %s20, 1
        %s261 = scalar_select %p260, %s20, 1
        %s262 = smul.addr %s261, 2
        %s263 = smul.addr %s262, 8
        %s264 = scalar_lea.vmem %s0, %s263
        %p265 = scmp.lt.s32.totalorder %s20, 1
        %s266 = scalar_select %p265, %s20, 1
        %s267 = smul.addr %s266, 2
        %s268 = smul.addr %s267, 8
        %s269 = scalar_lea.vmem %s1, %s268
        %v271 = vld [vmem:[%s264] sm:$0xff]
        %v272 = vld [vmem:[%s264 + $0x8] sm:$0xff]
        %v273 = vpack.c.bf16 %v272, %v271
        %v274 = vld [vmem:[%s2] sm:$0xff]
        %v275 = vld [vmem:[%s2 + $0x8] sm:$0xff]
        %v276 = vpack.c.bf16 %v275, %v274
        %s277 = scalar_lea.vmem %s2, 16
        %v278 = vld [vmem:[%s277] sm:$0xff]
        %v279 = vld [vmem:[%s277 + $0x8] sm:$0xff]
        %v280 = vpack.c.bf16 %v279, %v278
        %v282 = vunpack.c.l.b16 %v273
        %v283 = vunpack.c.h.b16 %v273
        %v284 = vpack.c.b16 %v282, %v282
        %v285 = vpack.c.b16 %v283, %v283
        %286 = vrot.lane.b32.xlu0 %v284, 127
        %v287 = vpop.permute.xlu0 %286
        %288 = vrot.lane.b32.xlu0 %v285, 127
        %v289 = vpop.permute.xlu0 %288
        %vm290 = vcmask 1039360
        %v291 = vsel %vm290, %v287, %v289
        %vm292 = vcmask 64512
        %v294 = vsel %vm292, %v280, 0
        %vm296 = vcmask 1043456
        %v298 = vsel %vm296, %v291, 0
        %300 = vmatpush.bf16.msra.mxu0 0
        %301 = vmatpush.bf16.msra.mxu0 0
        %302 = vmatpush.bf16.msra.mxu0 0
        %303 = vmatpush.bf16.msra.mxu0 0
        %304 = vmatpush.bf16.msra.mxu0 0
        %305 = vmatpush.bf16.msra.mxu0 0
        %306 = vmatpush.bf16.msra.mxu0 0
        %307 = vmatpush.bf16.msra.mxu0 %v298
        %308 = vmatmul.bf16.gmra.mxu0 %v294
        %v309 = vpop.f32.mrf.mxu0
        %v310 = vadd.f32 0.0, %v309
        %v311 = vpop.f32.mrf.mxu0
        %v312 = vadd.f32 0.0, %v311
        %313 = vdwg.mxu0
        %v315 = vsel %vm292, %v276, 0
        %v318 = vsel %vm296, %v273, 0
        %320 = vmatpush.bf16.msra.mxu0 0
        %321 = vmatpush.bf16.msra.mxu0 0
        %322 = vmatpush.bf16.msra.mxu0 0
        %323 = vmatpush.bf16.msra.mxu0 0
        %324 = vmatpush.bf16.msra.mxu0 0
        %325 = vmatpush.bf16.msra.mxu0 0
        %326 = vmatpush.bf16.msra.mxu0 0
        %327 = vmatpush.bf16.msra.mxu0 %v318
        %328 = vmatmul.bf16.gmra.mxu0 %v315
        %v329 = vpop.f32.mrf.mxu0
        %v330 = vadd.f32 %v310, %v329
        %v331 = vpop.f32.mrf.mxu0
        %v332 = vadd.f32 %v312, %v331
        %333 = vdwg.mxu0
        %s334 = scalar_lea.vmem %s2, 32
        %v335 = vld [vmem:[%s334] sm:$0xff]
        %v336 = vld [vmem:[%s334 + $0x8] sm:$0xff]
        %v337 = vpack.c.bf16 %v336, %v335
        %338 = vrot.lane.b32.xlu0 %v284, 126
        %v339 = vpop.permute.xlu0 %338
        %340 = vrot.lane.b32.xlu0 %v285, 126
        %v341 = vpop.permute.xlu0 %340
        %vm342 = vcmask 1031168
        %v343 = vsel %vm342, %v339, %v341
        %v345 = vsel %vm292, %v337, 0
        %v348 = vsel %vm296, %v343, 0
        %350 = vmatpush.bf16.msra.mxu0 0
        %351 = vmatpush.bf16.msra.mxu0 0
        %352 = vmatpush.bf16.msra.mxu0 0
        %353 = vmatpush.bf16.msra.mxu0 0
        %354 = vmatpush.bf16.msra.mxu0 0
        %355 = vmatpush.bf16.msra.mxu0 0
        %356 = vmatpush.bf16.msra.mxu0 0
        %357 = vmatpush.bf16.msra.mxu0 %v348
        %358 = vmatmul.bf16.gmra.mxu0 %v345
        %v359 = vpop.f32.mrf.mxu0
        %v360 = vadd.f32 0.0, %v359
        %v361 = vpop.f32.mrf.mxu0
        %v362 = vadd.f32 0.0, %v361
        %363 = vdwg.mxu0
        %v364 = vadd.f32 %v330, %v360
        %v365 = vadd.f32 %v332, %v362
        %v366 = vld [vmem:[%s3] sm:$0xff]
        %v367 = vld [vmem:[%s3 + $0x8] sm:$0xff]
        %369 = vset.pattern.permute.xlu0 0
        %370 = vperm.xlu0 %369, %v366
        %v371 = vpop.permute.xlu0 %370
        %374 = vset.pattern.permute.xlu0 0
        %375 = vperm.xlu0 %374, %v367
        %v376 = vpop.permute.xlu0 %375
        %v378 = vadd.f32 %v364, %v371
        %v379 = vadd.f32 %v365, %v376
        %v380 = vlaneseq
        %v381 = vand.u32 %v380, 127
        %vm382 = vcmp.lt.s32.totalorder %v381, 16
        %v383 = vsel %vm382, 1, 0
        %vm384 = vcmp.eq.s32.totalorder %v383, 1
        %v385 = vsel %vm384, %v378, 0.0
        %v386 = vsel %vm384, %v379, 0.0
        %v387 = vadd.f32 %v385, %v386
        %388 = vadd.xlane.f32.xlu0 %v387
        %v389 = vpop.xlane.xlu0 %388
        %v390 = vrot.slane %v389, 4
        %v391 = vadd.f32 %v389, %v390
        %v392 = vrot.slane %v391, 2
        %v393 = vadd.f32 %v391, %v392
        %v394 = vrot.slane %v393, 1
        %v395 = vadd.f32 %v393, %v394
        %s396 = vtos %v395
        %v397 = vmul.f32 %v385, %v385
        %v398 = vmul.f32 %v386, %v386
        %v399 = vadd.f32 %v397, %v398
        %400 = vadd.xlane.f32.xlu0 %v399
        %v401 = vpop.xlane.xlu0 %400
        %v402 = vrot.slane %v401, 4
        %v403 = vadd.f32 %v401, %v402
        %v404 = vrot.slane %v403, 2
        %v405 = vadd.f32 %v403, %v404
        %v406 = vrot.slane %v405, 1
        %v407 = vadd.f32 %v405, %v406
        %s408 = vtos %v407
        %v409 = vrcp.pop 256.0
        %v410 = vmul.f32 256.0, %v409
        %v411 = vsub.f32 1.0, %v410
        %v412 = vmul.f32 %v409, %v411
        %v413 = vadd.f32 %v409, %v412
        %vm414 = vweird.f32 %v409
        %v415 = vsel %vm414, %v409, %v413
        %s416 = vtos %v415
        %s417 = smul.f32 %s396, %s416
        %v418 = vrcp.pop 256.0
        %v419 = vmul.f32 256.0, %v418
        %v420 = vsub.f32 1.0, %v419
        %v421 = vmul.f32 %v418, %v420
        %v422 = vadd.f32 %v418, %v421
        %vm423 = vweird.f32 %v418
        %v424 = vsel %vm423, %v418, %v422
        %s425 = vtos %v424
        %s426 = smul.f32 %s408, %s425
        %s427 = smul.f32 %s417, %s417
        %s428 = ssub.f32 %s426, %s427
        %s429 = smax.f32 %s428, 0.0
        %s430 = sadd.f32 %s429, 1e-08
        %v431 = vstv %s430
        %v432 = vrsqrt.pop %v431
        %v433 = vmul.f32 %v432, %v431
        %v434 = vmul.f32 %v433, %v432
        %v435 = vmul.f32 0.5, %v434
        %v436 = vsub.f32 1.5, %v435
        %v437 = vmul.f32 %v432, %v436
        %vm438 = vweird.f32 %v431
        %vm439 = vweird.f32 %v432
        %vm440 = vmor %vm438, %vm439
        %v441 = vsel %vm440, %v432, %v437
        %s442 = vtos %v441
        %v443 = vld [vmem:[%s4] sm:$0xff]
        %v444 = vld [vmem:[%s4 + $0x8] sm:$0xff]
        %v445 = vstv %s417
        %v446 = vsub.f32 %v378, %v445
        %v447 = vsub.f32 %v379, %v445
        %v448 = vstv %s442
        %v449 = vmul.f32 %v446, %v448
        %v450 = vmul.f32 %v447, %v448
        %452 = vset.pattern.permute.xlu0 0
        %453 = vperm.xlu0 %452, %v443
        %v454 = vpop.permute.xlu0 %453
        %457 = vset.pattern.permute.xlu0 0
        %458 = vperm.xlu0 %457, %v444
        %v459 = vpop.permute.xlu0 %458
        %v461 = vmul.f32 %v454, %v449
        %v462 = vmul.f32 %v459, %v450
        %v463 = vld [vmem:[%s5] sm:$0xff]
        %v464 = vld [vmem:[%s5 + $0x8] sm:$0xff]
        %466 = vset.pattern.permute.xlu0 0
        %467 = vperm.xlu0 %466, %v463
        %v468 = vpop.permute.xlu0 %467
        %471 = vset.pattern.permute.xlu0 0
        %472 = vperm.xlu0 %471, %v464
        %v473 = vpop.permute.xlu0 %472
        %v475 = vadd.f32 %v461, %v468
        %v476 = vadd.f32 %v462, %v473
        %v477 = vld [vmem:[%s269] sm:$0xff]
        %v478 = vld [vmem:[%s269 + $0x8] sm:$0xff]
        %v479 = vadd.f32 %v475, %v477
        %v480 = vadd.f32 %v476, %v478
        %vm481 = vcmask 130048
        %482 = vst.msk [vmem:[%s259] sm:$0xff] %vm481, %v479
        %483 = vst.msk [vmem:[%s259 + $0x8] sm:$0xff] %vm481, %v480
        %s484 = sand.u32 %s164, 1
        %s485 = scalar_lea.sflag [#allocation3], %s484
        %s486 = sand.u32 %s164, 1
        %s487 = smul.addr %s486, 16
        %s488 = scalar_lea.vmem [#allocation2], %s487
        // Predicated region
        $region45: #{_lambda_.2} parent=43 // pred_check
          %p489 = pneg %p174
        $region46: #{_lambda_.2} parent=43 // pred_check_branch
          %491 = sbr.rel (%p489) target = $region48
        $region47: #{_lambda_.2} parent=43 // pred_region
          %493 = vsyncadd %s485, 0
          %s494 = smul.addr %s20, 2
          %s495 = smul.addr %s494, 8
          %s496 = scalar_lea.hbm %s6, %s495
          %s497 = sshll.u32 %s488, 4
          %s498 = int_to_ptr.vmem [resolvable:$true] %s497
          %s499 = sshll.u32 %s496, 4
          %s500 = int_to_ptr.hbm [resolvable:$true] %s499
          %505 = dma.vmem_to_hbm [thread:$0]  %s498, 256, %s500, %s485, 128, 128, 8
        $region48: #{_lambda_.2} parent=43 // pred_fallthru
          _
      $region44: #{_lambda_.2} parent=5 // pred_fallthru
        _
      %p506 = scmp.le.s32.totalorder 2, %s15
      // Predicated region
      $region49: #{_lambda_.2} parent=5 // pred_check
        %p507 = pneg %p506
      $region50: #{_lambda_.2} parent=5 // pred_check_branch
        %509 = sbr.rel (%p507) target = $region52
      $region51: #{_lambda_.2} parent=5 // pred_region
        %s510 = ssub.s32 %s15, 2
        // Predicated region
        $region53: #{_lambda_.2} parent=51 // pred_check
          %p511 = pneg %p180
        $region54: #{_lambda_.2} parent=51 // pred_check_branch
          %513 = sbr.rel (%p511) target = $region56
        $region55: #{_lambda_.2} parent=51 // pred_region
          %s514 = sand.u32 %s165, 1
          %s515 = scalar_lea.sflag [#allocation3], %s514
          %s516 = sand.u32 %s165, 1
          %s517 = smul.addr %s516, 16
          %s518 = scalar_lea.vmem [#allocation2], %s517
          %520 = dma.done %s515, 256
        $region56: #{_lambda_.2} parent=51 // pred_fallthru
          _
      $region52: #{_lambda_.2} parent=5 // pred_fallthru
        _
    $region6: #{_lambda_.2} parent=1 // loop_footer
      %s19 = sadd.s32 1, %s15
    $region7: #{_lambda_.2} parent=1 // loop_footer_branch
      %14 = sbr.rel target = $region3
    $region8: #{_lambda_.2} parent=1 // loop_exit
      _
    %521 = vsyncpa [#allocation3], 1
    %s522 = scalar_lea.sflag [#allocation3], 1
    %523 = vsyncpa %s522, 1

</llo_original>
